<compile_context>
chip_gen: v6e
topology: v6e:2x2x1
jax: 0.10.0
libtpu: 0.0.40
codegen_flags: <defaults>
</compile_context>

<pallas_src>
import functools

import jax
import jax.numpy as jnp
from jax.experimental import pallas as pl
from jax.experimental.pallas import tpu as pltpu

_LANE = 128


def _round_up(v, m):
    return ((v + m - 1) // m) * m


def _critic_kernel(*refs, has_h, vpu_head):
    if has_h:
        (x_ref, h0_ref, w_ih_ref, w_hh_ref, b_rnn_ref,
         w1_ref, b1_ref, w2_ref, b2_ref, out_ref) = refs
    else:
        (x_ref, w_ih_ref, b_rnn_ref,
         w1_ref, b1_ref, w2_ref, b2_ref, out_ref) = refs

    # RNN cell (seq_len == 1): h = tanh(x @ Wih^T [+ h0 @ Whh^T] + (b_ih + b_hh))
    z = jnp.dot(x_ref[...], w_ih_ref[...], preferred_element_type=jnp.float32)
    if has_h:
        z = z + jnp.dot(h0_ref[...], w_hh_ref[...],
                        preferred_element_type=jnp.float32)
    h = jnp.tanh(z + b_rnn_ref[...])          # VPU bias add: free under matmul slack

    # fc1 + ReLU (one native 128x128 MXU tile thanks to padding)
    f = jnp.maximum(
        jnp.dot(h, w1_ref[...], preferred_element_type=jnp.float32) + b1_ref[...],
        0.0)

    if vpu_head:
        # num_output == 1: w2_ref is a (1, Hp) row, b2_ref a (1,1) SMEM scalar.
        # w2 @ f.T gives a lane-dense (1, tb) row (batch on the lane axis) so the
        # output store is a dense vst instead of 1-live-lane masked stores.
        v = jnp.dot(w2_ref[...], f.T, preferred_element_type=jnp.float32)
        v = v + b2_ref[0, 0]
    else:
        # General num_output: regular MXU head, (tb, O) output.
        v = jnp.dot(f, w2_ref[...], preferred_element_type=jnp.float32) + b2_ref[...]

    out_ref[...] = v.astype(out_ref.dtype)


def prepare_critic_params(params):
    """One-time conversion of PyTorch-layout params into kernel-ready layout.

    Everything batch-independent happens here (transposes, b_ih+b_hh sum,
    zero-padding of the hidden dim to 128 lanes) so the per-call forward path
    dispatches nothing but the pallas_call.
    """
    f32 = jnp.float32
    H = params["w_hh"].shape[0]
    O = params["w_out"].shape[0]
    Hp = _round_up(H, _LANE)
    ph = Hp - H

    def pad_lanes(m):
        return jnp.pad(m.astype(f32), ((0, 0), (0, ph)))

    kp = {
        "w_ih_t": pad_lanes(params["w_ih"].T),                                  # (I, Hp)
        "w_hh_t": pad_lanes(params["w_hh"].T),                                  # (H, Hp)
        "b_rnn": pad_lanes((params["b_ih"] + params["b_hh"]).reshape(1, H)),    # (1, Hp)
        "w_fc1_t": jnp.pad(params["w_fc1"].T.astype(f32), ((0, ph), (0, ph))),  # (Hp, Hp)
        "b_fc1": pad_lanes(params["b_fc1"].reshape(1, H)),                      # (1, Hp)
    }
    if O == 1:
        kp["w_out"] = pad_lanes(params["w_out"].reshape(1, H))       # (1, Hp) row
        kp["b_out"] = params["b_out"].reshape(1, 1).astype(f32)      # SMEM scalar
    else:
        kp["w_out"] = jnp.pad(params["w_out"].T.astype(f32), ((0, ph), (0, 0)))  # (Hp, O)
        kp["b_out"] = params["b_out"].reshape(1, O).astype(f32)
    return kp


@functools.partial(jax.jit, static_argnames=("batch_tile",))
def critic_forward(x, kparams, h_state=None, *, batch_tile=2048):
    """Fused Critic forward.  x: (B, input_num) -> (B, num_output)."""
    x = x.astype(jnp.float32)
    B, I = x.shape
    H, Hp = kparams["w_hh_t"].shape
    vpu_head = kparams["b_out"].size == 1
    O = 1 if vpu_head else kparams["b_out"].shape[-1]
    has_h = h_state is not None

    # Batch tiling: one full-VMEM block until the batch gets large, then a
    # pl.cdiv grid of aligned tiles (masked tail handles any B).
    if B > batch_tile:
        assert batch_tile % _LANE == 0, "batch_tile must be a multiple of 128"
        tb = batch_tile
    else:
        tb = B
    grid_len = pl.cdiv(B, tb)

    vmem = pltpu.MemorySpace.VMEM
    smem = pltpu.MemorySpace.SMEM

    def row_spec(ncols):   # activations: stream over the batch axis
        return pl.BlockSpec((tb, ncols), lambda i: (i, 0), memory_space=vmem)

    def const_spec(arr):   # weights: same (full) block at every grid step
        return pl.BlockSpec(arr.shape, lambda i: (0, 0), memory_space=vmem)

    operands = [x]
    in_specs = [row_spec(I)]
    if has_h:
        h0 = h_state.reshape(B, H).astype(jnp.float32)
        operands.append(h0)
        in_specs.append(row_spec(H))
    operands.append(kparams["w_ih_t"])
    in_specs.append(const_spec(kparams["w_ih_t"]))
    if has_h:
        operands.append(kparams["w_hh_t"])
        in_specs.append(const_spec(kparams["w_hh_t"]))
    for name in ("b_rnn", "w_fc1_t", "b_fc1", "w_out"):
        operands.append(kparams[name])
        in_specs.append(const_spec(kparams[name]))
    operands.append(kparams["b_out"])

    if vpu_head:
        # num_output == 1: SMEM scalar bias, lane-dense (1, B) output slab.
        in_specs.append(pl.BlockSpec((1, 1), lambda i: (0, 0), memory_space=smem))
        out_shape = jax.ShapeDtypeStruct((1, B), jnp.float32)
        out_spec = pl.BlockSpec((1, tb), lambda i: (0, i), memory_space=vmem)
    else:
        in_specs.append(const_spec(kparams["b_out"]))
        out_shape = jax.ShapeDtypeStruct((B, O), jnp.float32)
        out_spec = pl.BlockSpec((tb, O), lambda i: (i, 0), memory_space=vmem)

    out = pl.pallas_call(
        functools.partial(_critic_kernel, has_h=has_h, vpu_head=vpu_head),
        out_shape=out_shape,
        grid=(grid_len,),
        in_specs=in_specs,
        out_specs=out_spec,
        compiler_params=pltpu.CompilerParams(
            dimension_semantics=("parallel",)),
    )(*operands)

    if vpu_head:
        # (1, B) lane-dense slab -> (B, 1); row-major contiguous, so it's free.
        out = out.reshape(B, 1)
    return out


def init_critic_params(key, input_num, hidden_num, num_output=1):
    """Deterministic init mimicking PyTorch defaults (U(-1/sqrt(fan), 1/sqrt(fan)))."""
    ks = jax.random.split(key, 8)
    k_rnn = 1.0 / jnp.sqrt(hidden_num)
    u = lambda k, shape, bound: jax.random.uniform(
        k, shape, jnp.float32, minval=-bound, maxval=bound)
    return {
        "w_ih": u(ks[0], (hidden_num, input_num), k_rnn),
        "w_hh": u(ks[1], (hidden_num, hidden_num), k_rnn),
        "b_ih": u(ks[2], (hidden_num,), k_rnn),
        "b_hh": u(ks[3], (hidden_num,), k_rnn),
        "w_fc1": u(ks[4], (hidden_num, hidden_num), k_rnn),
        "b_fc1": u(ks[5], (hidden_num,), k_rnn),
        "w_out": u(ks[6], (num_output, hidden_num), k_rnn),
        "b_out": u(ks[7], (num_output,), k_rnn),
    }


def _reference_forward(x, params, h_state=None):
    """Pure-JAX reference matching PyTorch Critic semantics."""
    B = x.shape[0]
    H = params["w_hh"].shape[0]
    h0 = jnp.zeros((B, H), jnp.float32) if h_state is None else h_state.reshape(B, H)
    h = jnp.tanh(x @ params["w_ih"].T + h0 @ params["w_hh"].T
                 + params["b_ih"] + params["b_hh"])
    f = jax.nn.relu(h @ params["w_fc1"].T + params["b_fc1"])
    return f @ params["w_out"].T + params["b_out"]


if __name__ == "__main__":
    key = jax.random.PRNGKey(0)
    k_param, k_param3, k_x, k_h, k_xb, k_hb = jax.random.split(key, 6)

    B, input_num, hidden_num, num_output = 2, 4, 32, 1
    params = init_critic_params(k_param, input_num, hidden_num, num_output)
    kparams = prepare_critic_params(params)   # one-time, hoisted off the forward path
    x = jax.random.normal(k_x, (B, input_num), dtype=jnp.float32)

    # 1) Zero initial hidden state (h_state=None), num_output == 1 head.
    v0 = jax.block_until_ready(critic_forward(x, kparams))
    ref0 = _reference_forward(x, params)
    assert v0.shape == (B, num_output)
    assert jnp.allclose(v0, ref0, atol=1e-5, rtol=1e-5), (v0, ref0)

    # 2) Explicit hidden state ((num_layers=1, B, H), PyTorch convention).
    h0 = jax.random.normal(k_h, (1, B, hidden_num), dtype=jnp.float32)
    v1 = jax.block_until_ready(critic_forward(x, kparams, h0))
    ref1 = _reference_forward(x, params, h0)
    assert jnp.allclose(v1, ref1, atol=1e-5, rtol=1e-5), (v1, ref1)

    # 3) Medium batch: still one full-VMEM block (no grid overhead on 1-TC chips).
    Bm = 1024
    xm = jax.random.normal(k_xb, (Bm, input_num), dtype=jnp.float32)
    vm = jax.block_until_ready(critic_forward(xm, kparams))
    refm = _reference_forward(xm, params)
    assert vm.shape == (Bm, num_output)
    assert jnp.allclose(vm, refm, atol=1e-4, rtol=1e-4)

    # 4) Large ragged batch with hidden state: cdiv grid (3 tiles of 2048, masked
    #    tail), lane-dense (1, B) output slab, parallel batch axis (v7x 2-TC).
    Bl = 5000
    xl = jax.random.normal(k_xb, (Bl, input_num), dtype=jnp.float32)
    hl = jax.random.normal(k_hb, (1, Bl, hidden_num), dtype=jnp.float32)
    vl = jax.block_until_ready(critic_forward(xl, kparams, hl))
    refl = _reference_forward(xl, params, hl)
    assert vl.shape == (Bl, num_output)
    assert jnp.allclose(vl, refl, atol=1e-4, rtol=1e-4)

    # 5) General num_output > 1 head (MXU head path).
    params3 = init_critic_params(k_param3, input_num, hidden_num, 3)
    kparams3 = prepare_critic_params(params3)
    v3 = jax.block_until_ready(critic_forward(x, kparams3))
    ref3 = _reference_forward(x, params3)
    assert v3.shape == (B, 3)
    assert jnp.allclose(v3, ref3, atol=1e-5, rtol=1e-5), (v3, ref3)

    print("KERNEL_OK")
</pallas_src>

<mosaic_0001>
module attributes {stable_mosaic.version = 11 : i64} {
  func.func @_critic_kernel(%arg0: i32, %arg1: memref<2x4xf32, #tpu.memory_space<vmem>>, %arg2: memref<4x128xf32, #tpu.memory_space<vmem>>, %arg3: memref<1x128xf32, #tpu.memory_space<vmem>>, %arg4: memref<128x128xf32, #tpu.memory_space<vmem>>, %arg5: memref<1x128xf32, #tpu.memory_space<vmem>>, %arg6: memref<1x128xf32, #tpu.memory_space<vmem>>, %arg7: memref<1x1xf32, #tpu.memory_space<smem>>, %arg8: memref<1x2xf32, #tpu.memory_space<vmem>>) attributes {dimension_semantics = [#tpu.dimension_semantics<parallel>], iteration_bounds = array<i64: 1>, scalar_prefetch = 0 : i64, scratch_operands = 0 : i64, tpu.core_type = #tpu.core_type<tc>, window_params = [{transform_indices = @transform_0, window_bounds = array<i64: 2, 4>}, {pipeline_mode = #tpu.pipeline_mode<synchronous>, transform_indices = @transform_1, window_bounds = array<i64: 4, 128>}, {pipeline_mode = #tpu.pipeline_mode<synchronous>, transform_indices = @transform_2, window_bounds = array<i64: 1, 128>}, {pipeline_mode = #tpu.pipeline_mode<synchronous>, transform_indices = @transform_3, window_bounds = array<i64: 128, 128>}, {pipeline_mode = #tpu.pipeline_mode<synchronous>, transform_indices = @transform_4, window_bounds = array<i64: 1, 128>}, {pipeline_mode = #tpu.pipeline_mode<synchronous>, transform_indices = @transform_5, window_bounds = array<i64: 1, 128>}, {transform_indices = @transform_6, window_bounds = array<i64: 1, 1>}, {transform_indices = @transform_7, window_bounds = array<i64: 1, 2>}]} {
    %c0 = arith.constant 0 : index
    %c0_0 = arith.constant 0 : index
    %0 = vector.load %arg1[%c0, %c0_0] : memref<2x4xf32, #tpu.memory_space<vmem>>, vector<2x4xf32>
    %c0_1 = arith.constant 0 : index
    %c0_2 = arith.constant 0 : index
    %1 = vector.load %arg2[%c0_1, %c0_2] : memref<4x128xf32, #tpu.memory_space<vmem>>, vector<4x128xf32>
    %cst = arith.constant dense<0.000000e+00> : vector<2x128xf32>
    %2 = tpu.matmul %0, %1, %cst {dimension_numbers = #tpu.dot_dimension_numbers<[1], [0], [0], [1], [0, 0, 1, 1], [], []>} : vector<2x4xf32>, vector<4x128xf32>, vector<2x128xf32> -> vector<2x128xf32>
    %c0_3 = arith.constant 0 : index
    %c0_4 = arith.constant 0 : index
    %3 = vector.load %arg3[%c0_3, %c0_4] : memref<1x128xf32, #tpu.memory_space<vmem>>, vector<1x128xf32>
    %4 = vector.broadcast %3 : vector<1x128xf32> to vector<2x128xf32>
    %5 = arith.addf %2, %4 : vector<2x128xf32>
    %6 = math.tanh %5 : vector<2x128xf32>
    %c0_5 = arith.constant 0 : index
    %c0_6 = arith.constant 0 : index
    %7 = vector.load %arg4[%c0_5, %c0_6] : memref<128x128xf32, #tpu.memory_space<vmem>>, vector<128x128xf32>
    %cst_7 = arith.constant dense<0.000000e+00> : vector<2x128xf32>
    %8 = tpu.matmul %6, %7, %cst_7 {dimension_numbers = #tpu.dot_dimension_numbers<[1], [0], [0], [1], [0, 0, 1, 1], [], []>} : vector<2x128xf32>, vector<128x128xf32>, vector<2x128xf32> -> vector<2x128xf32>
    %c0_8 = arith.constant 0 : index
    %c0_9 = arith.constant 0 : index
    %9 = vector.load %arg5[%c0_8, %c0_9] : memref<1x128xf32, #tpu.memory_space<vmem>>, vector<1x128xf32>
    %10 = vector.broadcast %9 : vector<1x128xf32> to vector<2x128xf32>
    %11 = arith.addf %8, %10 : vector<2x128xf32>
    %cst_10 = arith.constant 0.000000e+00 : f32
    %12 = vector.broadcast %cst_10 : f32 to vector<2x128xf32>
    %13 = arith.maximumf %11, %12 : vector<2x128xf32>
    %c0_11 = arith.constant 0 : index
    %c0_12 = arith.constant 0 : index
    %14 = vector.load %arg6[%c0_11, %c0_12] : memref<1x128xf32, #tpu.memory_space<vmem>>, vector<1x128xf32>
    %15 = tpu.transpose %13, [1, 0] : vector<2x128xf32> -> vector<128x2xf32>
    %cst_13 = arith.constant dense<0.000000e+00> : vector<1x2xf32>
    %16 = tpu.matmul %14, %15, %cst_13 {dimension_numbers = #tpu.dot_dimension_numbers<[1], [0], [0], [1], [0, 0, 1, 1], [], []>} : vector<1x128xf32>, vector<128x2xf32>, vector<1x2xf32> -> vector<1x2xf32>
    %c0_14 = arith.constant 0 : index
    %c0_15 = arith.constant 0 : index
    %17 = memref.load %arg7[%c0_14, %c0_15] : memref<1x1xf32, #tpu.memory_space<smem>>
    %18 = vector.broadcast %17 : f32 to vector<1x2xf32>
    %19 = arith.addf %16, %18 : vector<1x2xf32>
    %c0_16 = arith.constant 0 : index
    %c0_17 = arith.constant 0 : index
    %20 = vector.load %arg8[%c0_16, %c0_17] : memref<1x2xf32, #tpu.memory_space<vmem>>, vector<1x2xf32>
    tpu.vector_store %arg8[%c0_16, %c0_17], %19 {strides = array<i32>} : memref<1x2xf32, #tpu.memory_space<vmem>>, vector<1x2xf32>,
    return
  }
  func.func @transform_0(%arg0: i32) -> (i32, i32) {
    %c0_i32 = arith.constant 0 : i32
    %c0_i32_0 = arith.constant 0 : i32
    return %arg0, %c0_i32 : i32, i32
  }
  func.func @transform_1(%arg0: i32) -> (i32, i32) {
    %c0_i32 = arith.constant 0 : i32
    %c0_i32_0 = arith.constant 0 : i32
    %c0_i32_1 = arith.constant 0 : i32
    return %c0_i32, %c0_i32_0 : i32, i32
  }
  func.func @transform_2(%arg0: i32) -> (i32, i32) {
    %c0_i32 = arith.constant 0 : i32
    %c0_i32_0 = arith.constant 0 : i32
    %c0_i32_1 = arith.constant 0 : i32
    return %c0_i32, %c0_i32_0 : i32, i32
  }
  func.func @transform_3(%arg0: i32) -> (i32, i32) {
    %c0_i32 = arith.constant 0 : i32
    %c0_i32_0 = arith.constant 0 : i32
    %c0_i32_1 = arith.constant 0 : i32
    return %c0_i32, %c0_i32_0 : i32, i32
  }
  func.func @transform_4(%arg0: i32) -> (i32, i32) {
    %c0_i32 = arith.constant 0 : i32
    %c0_i32_0 = arith.constant 0 : i32
    %c0_i32_1 = arith.constant 0 : i32
    return %c0_i32, %c0_i32_0 : i32, i32
  }
  func.func @transform_5(%arg0: i32) -> (i32, i32) {
    %c0_i32 = arith.constant 0 : i32
    %c0_i32_0 = arith.constant 0 : i32
    %c0_i32_1 = arith.constant 0 : i32
    return %c0_i32, %c0_i32_0 : i32, i32
  }
  func.func @transform_6(%arg0: i32) -> (i32, i32) {
    %c0_i32 = arith.constant 0 : i32
    %c0_i32_0 = arith.constant 0 : i32
    %c0_i32_1 = arith.constant 0 : i32
    return %c0_i32, %c0_i32_0 : i32, i32
  }
  func.func @transform_7(%arg0: i32) -> (i32, i32) {
    %c0_i32 = arith.constant 0 : i32
    %c0_i32_0 = arith.constant 0 : i32
    return %c0_i32, %arg0 : i32, i32
  }
}

</mosaic_0001>

<llo_original>
// kernel: critic_forward.1
$region0: #{critic_forward.1}
  #allocation0 [shape = 'u32[]', space=smem, size = 0x4, offset = 0x4, fixed_abs, tag = 'smem constant byte address 0x4 - core index']
  #allocation1 [shape = 'u32[144,128]{1,0:T(1,128)}', space=vmem, size = 0x12000, scoped, tag = 'internal scratch']
  #allocation2 [shape = 'f32[1,1]{1,0:T(1,128)S(6)}', space=smem, size = 0x200, scoped, tag = 'scoped memory for critic_forward.1']
  %s0 = inlined_call_operand.vmem [shape: f32[2,4], index: 0, kind: input, shape index: {}]
  %s1 = inlined_call_operand.vmem [shape: f32[4,128], index: 1, kind: input, shape index: {}]
  %s2 = inlined_call_operand.vmem [shape: f32[1,128], index: 2, kind: input, shape index: {}]
  %s3 = inlined_call_operand.hbm [shape: f32[128,128], index: 3, kind: input, shape index: {}]
  %s4 = inlined_call_operand.hbm [shape: f32[1,128], index: 4, kind: input, shape index: {}]
  %s5 = inlined_call_operand.vmem [shape: f32[1,128], index: 5, kind: input, shape index: {}]
  %s6 = inlined_call_operand.<no memory space> [shape: f32[1,1], index: 6, kind: input, shape index: {}]
  %s7 = inlined_call_operand.hbm [shape: f32[1,2], index: 7, kind: output, shape index: {}]
  %s8 = sld [smem:[#allocation0]]
  $region46: #{critic_forward.1} parent=0
    _
  %s10 = ssub.s32 1, %s8
  %s11 = scalar_select 0, %s10, %s8
  %12 = sst [smem:[#allocation2]] %s6
  $region1: #{critic_forward.1} parent=0
    #allocation3 [shape = 'u8[65536]{0}', space=vmem, size = 0x10000, scoped, tag = 'input window, operand 3, single buffered']
    #allocation4 [shape = 's32[1]{0}', space=sflag, size = 0x4, scoped, tag = 'scoped memory for critic_forward.1']
    #allocation5 [shape = 's32[1]{0}', space=sflag, size = 0x4, scoped, tag = 'scoped memory for critic_forward.1']
    #allocation6 [shape = 'u8[512]{0}', space=vmem, size = 0x400, scoped, tag = 'input window, operand 4, single buffered']
    #allocation7 [shape = 's32[1]{0}', space=sflag, size = 0x4, scoped, tag = 'scoped memory for critic_forward.1']
    #allocation8 [shape = 'u8[512]{0}', space=vmem, size = 0x400, scoped, tag = 'output window, operand 0, single buffered']
    %13 = vsyncpa [#allocation4], 0
    %14 = vsyncpa [#allocation7], 0
    %15 = vsyncpa [#allocation5], 0
    // Predicated region
    $region2: #{critic_forward.1} parent=1 // pred_check
      _
    $region3: #{critic_forward.1} parent=1 // pred_check_branch
      %17 = sbr.rel (0) target = $region5
    $region4: #{critic_forward.1} parent=1 // pred_region
      _
    $region5: #{critic_forward.1} parent=1 // pred_fallthru
      _
    // Predicated region
    $region6: #{critic_forward.1} parent=1 // pred_check
      _
    $region7: #{critic_forward.1} parent=1 // pred_check_branch
      %19 = sbr.rel (0) target = $region9
    $region8: #{critic_forward.1} parent=1 // pred_region
      _
    $region9: #{critic_forward.1} parent=1 // pred_fallthru
      _
    // Predicated region
    $region10: #{critic_forward.1} parent=1 // pred_check
      _
    $region11: #{critic_forward.1} parent=1 // pred_check_branch
      %21 = sbr.rel (0) target = $region13
    $region12: #{critic_forward.1} parent=1 // pred_region
      _
    $region13: #{critic_forward.1} parent=1 // pred_fallthru
      _
    // Predicated region
    $region14: #{critic_forward.1} parent=1 // pred_check
      _
    $region15: #{critic_forward.1} parent=1 // pred_check_branch
      %23 = sbr.rel (0) target = $region17
    $region16: #{critic_forward.1} parent=1 // pred_region
      %s25 = ssub.s32 2048, 2048
      %26 = vsyncadd [#allocation4], %s25
      %s27 = sshll.u32 [#allocation3], 4
      %s28 = int_to_ptr.vmem [resolvable:$true] %s27
      %33 = dma.hbm_to_vmem [thread:$0]  %s3, 2048, %s28, [#allocation4], 128, 128, 8
    $region17: #{critic_forward.1} parent=1 // pred_fallthru
      _
    // Predicated region
    $region18: #{critic_forward.1} parent=1 // pred_check
      _
    $region19: #{critic_forward.1} parent=1 // pred_check_branch
      %35 = sbr.rel (0) target = $region21
    $region20: #{critic_forward.1} parent=1 // pred_region
      %s37 = ssub.s32 16, 16
      %38 = vsyncadd [#allocation7], %s37
      %s40 = sshll.u32 [#allocation6], 4
      %s41 = int_to_ptr.vmem [resolvable:$true] %s40
      %43 = dma.hbm_to_vmem [thread:$0]  %s4, 16, %s41, [#allocation7]
    $region21: #{critic_forward.1} parent=1 // pred_fallthru
      _
    // Predicated region
    $region22: #{critic_forward.1} parent=1 // pred_check
      _
    $region23: #{critic_forward.1} parent=1 // pred_check_branch
      %45 = sbr.rel (0) target = $region25
    $region24: #{critic_forward.1} parent=1 // pred_region
      _
    $region25: #{critic_forward.1} parent=1 // pred_fallthru
      _
    // Predicated region
    $region26: #{critic_forward.1} parent=1 // pred_check
      _
    $region27: #{critic_forward.1} parent=1 // pred_check_branch
      %47 = sbr.rel (0) target = $region29
    $region28: #{critic_forward.1} parent=1 // pred_region
      _
    $region29: #{critic_forward.1} parent=1 // pred_fallthru
      _
    // Predicated region
    $region30: #{critic_forward.1} parent=1 // pred_check
      _
    $region31: #{critic_forward.1} parent=1 // pred_check_branch
      %49 = sbr.rel (0) target = $region33
    $region32: #{critic_forward.1} parent=1 // pred_region
      %50 = dma.done [#allocation4], 2048
    $region33: #{critic_forward.1} parent=1 // pred_fallthru
      _
    // Predicated region
    $region34: #{critic_forward.1} parent=1 // pred_check
      _
    $region35: #{critic_forward.1} parent=1 // pred_check_branch
      %52 = sbr.rel (0) target = $region37
    $region36: #{critic_forward.1} parent=1 // pred_region
      %53 = dma.done [#allocation7], 16
    $region37: #{critic_forward.1} parent=1 // pred_fallthru
      _
    %v54 = vld [vmem:[%s0] sm:$0x3]
    %v55 = vld [vmem:[%s1] sm:$0xf]
    %v56 = vld [vmem:[%s2] sm:$0x1]
    %v58 = vlaneseq
    %v59 = vshrl.u32 %v58, 7
    %v60 = vsub.s32 0, %v59
    %v61 = vrot.slane %v56, %v60
    %vm63 = vcmask 31744
    %v65 = vsel %vm63, %v54, 0
    %vm67 = vcmask 1043456
    %v69 = vsel %vm67, %v55, 0
    %71 = vmatprep.subr.mxu0 0.0
    %72 = vmatpush1.msra.mxu0 0.0
    %73 = vmatprep.subr.mxu0 0.0
    %74 = vmatpush1.msra.mxu0 0.0
    %75 = vmatprep.subr.mxu0 0.0
    %76 = vmatpush1.msra.mxu0 0.0
    %77 = vmatprep.subr.mxu0 0.0
    %78 = vmatpush1.msra.mxu0 0.0
    %79 = vmatprep.subr.mxu0 0.0
    %80 = vmatpush1.msra.mxu0 0.0
    %81 = vmatprep.subr.mxu0 0.0
    %82 = vmatpush1.msra.mxu0 0.0
    %83 = vmatprep.subr.mxu0 0.0
    %84 = vmatpush1.msra.mxu0 0.0
    %85 = vmatprep.subr.mxu0 0.0
    %86 = vmatpush1.msra.mxu0 0.0
    %87 = vmatprep.subr.mxu0 0.0
    %88 = vmatpush1.msra.mxu0 0.0
    %89 = vmatprep.subr.mxu0 0.0
    %90 = vmatpush1.msra.mxu0 0.0
    %91 = vmatprep.subr.mxu0 0.0
    %92 = vmatpush1.msra.mxu0 0.0
    %93 = vmatprep.subr.mxu0 0.0
    %94 = vmatpush1.msra.mxu0 0.0
    %95 = vmatprep.subr.mxu0 0.0
    %96 = vmatpush1.msra.mxu0 0.0
    %97 = vmatprep.subr.mxu0 0.0
    %98 = vmatpush1.msra.mxu0 0.0
    %99 = vmatprep.subr.mxu0 0.0
    %100 = vmatpush1.msra.mxu0 0.0
    %101 = vmatprep.subr.mxu0 0.0
    %102 = vmatpush1.msra.mxu0 %v69
    %103 = vmatprep.subr.mxu0 0.0
    %104 = vmatpush2.msra.mxu0 0.0
    %105 = vmatprep.subr.mxu0 0.0
    %106 = vmatpush2.msra.mxu0 0.0
    %107 = vmatprep.subr.mxu0 0.0
    %108 = vmatpush2.msra.mxu0 0.0
    %109 = vmatprep.subr.mxu0 0.0
    %110 = vmatpush2.msra.mxu0 0.0
    %111 = vmatprep.subr.mxu0 0.0
    %112 = vmatpush2.msra.mxu0 0.0
    %113 = vmatprep.subr.mxu0 0.0
    %114 = vmatpush2.msra.mxu0 0.0
    %115 = vmatprep.subr.mxu0 0.0
    %116 = vmatpush2.msra.mxu0 0.0
    %117 = vmatprep.subr.mxu0 0.0
    %118 = vmatpush2.msra.mxu0 0.0
    %119 = vmatprep.subr.mxu0 0.0
    %120 = vmatpush2.msra.mxu0 0.0
    %121 = vmatprep.subr.mxu0 0.0
    %122 = vmatpush2.msra.mxu0 0.0
    %123 = vmatprep.subr.mxu0 0.0
    %124 = vmatpush2.msra.mxu0 0.0
    %125 = vmatprep.subr.mxu0 0.0
    %126 = vmatpush2.msra.mxu0 0.0
    %127 = vmatprep.subr.mxu0 0.0
    %128 = vmatpush2.msra.mxu0 0.0
    %129 = vmatprep.subr.mxu0 0.0
    %130 = vmatpush2.msra.mxu0 0.0
    %131 = vmatprep.subr.mxu0 0.0
    %132 = vmatpush2.msra.mxu0 0.0
    %133 = vmatprep.subr.mxu0 0.0
    %134 = vmatpush2.msra.mxu0 0.0
    %135 = vmatprep.mubr.f32.mxu0 0.0
    %136 = vmatmul.mubr.f32.gmra.mxu0 %v65
    %v137 = vpop.f32.mrf.mxu0
    %v138 = vadd.f32 %v61, %v137
    %v139 = vpop.f32.mrf.mxu0
    %140 = vdwg.mxu0
    %v141 = vtanh.pop %v138
    %v142 = vld [vmem:[#allocation3] sm:$0xff]
    %v143 = vld [vmem:[#allocation3 + $0x8] sm:$0xff]
    %v144 = vld [vmem:[#allocation3 + $0x10] sm:$0xff]
    %v145 = vld [vmem:[#allocation3 + $0x18] sm:$0xff]
    %v146 = vld [vmem:[#allocation3 + $0x20] sm:$0xff]
    %v147 = vld [vmem:[#allocation3 + $0x28] sm:$0xff]
    %v148 = vld [vmem:[#allocation3 + $0x30] sm:$0xff]
    %v149 = vld [vmem:[#allocation3 + $0x38] sm:$0xff]
    %v150 = vld [vmem:[#allocation3 + $0x40] sm:$0xff]
    %v151 = vld [vmem:[#allocation3 + $0x48] sm:$0xff]
    %v152 = vld [vmem:[#allocation3 + $0x50] sm:$0xff]
    %v153 = vld [vmem:[#allocation3 + $0x58] sm:$0xff]
    %v154 = vld [vmem:[#allocation3 + $0x60] sm:$0xff]
    %v155 = vld [vmem:[#allocation3 + $0x68] sm:$0xff]
    %v156 = vld [vmem:[#allocation3 + $0x70] sm:$0xff]
    %v157 = vld [vmem:[#allocation3 + $0x78] sm:$0xff]
    %v158 = vld [vmem:[#allocation6] sm:$0x1]
    %v160 = vlaneseq
    %v161 = vshrl.u32 %v160, 7
    %v162 = vsub.s32 0, %v161
    %v163 = vrot.slane %v158, %v162
    %165 = vmatprep.subr.mxu0 0.0
    %166 = vmatpush1.msra.mxu0 %v157
    %167 = vmatprep.subr.mxu0 0.0
    %168 = vmatpush1.msra.mxu0 %v156
    %169 = vmatprep.subr.mxu0 0.0
    %170 = vmatpush1.msra.mxu0 %v155
    %171 = vmatprep.subr.mxu0 0.0
    %172 = vmatpush1.msra.mxu0 %v154
    %173 = vmatprep.subr.mxu0 0.0
    %174 = vmatpush1.msra.mxu0 %v153
    %175 = vmatprep.subr.mxu0 0.0
    %176 = vmatpush1.msra.mxu0 %v152
    %177 = vmatprep.subr.mxu0 0.0
    %178 = vmatpush1.msra.mxu0 %v151
    %179 = vmatprep.subr.mxu0 0.0
    %180 = vmatpush1.msra.mxu0 %v150
    %181 = vmatprep.subr.mxu0 0.0
    %182 = vmatpush1.msra.mxu0 %v149
    %183 = vmatprep.subr.mxu0 0.0
    %184 = vmatpush1.msra.mxu0 %v148
    %185 = vmatprep.subr.mxu0 0.0
    %186 = vmatpush1.msra.mxu0 %v147
    %187 = vmatprep.subr.mxu0 0.0
    %188 = vmatpush1.msra.mxu0 %v146
    %189 = vmatprep.subr.mxu0 0.0
    %190 = vmatpush1.msra.mxu0 %v145
    %191 = vmatprep.subr.mxu0 0.0
    %192 = vmatpush1.msra.mxu0 %v144
    %193 = vmatprep.subr.mxu0 0.0
    %194 = vmatpush1.msra.mxu0 %v143
    %195 = vmatprep.subr.mxu0 0.0
    %196 = vmatpush1.msra.mxu0 %v142
    %197 = vmatprep.subr.mxu0 0.0
    %198 = vmatpush2.msra.mxu0 0.0
    %199 = vmatprep.subr.mxu0 0.0
    %200 = vmatpush2.msra.mxu0 0.0
    %201 = vmatprep.subr.mxu0 0.0
    %202 = vmatpush2.msra.mxu0 0.0
    %203 = vmatprep.subr.mxu0 0.0
    %204 = vmatpush2.msra.mxu0 0.0
    %205 = vmatprep.subr.mxu0 0.0
    %206 = vmatpush2.msra.mxu0 0.0
    %207 = vmatprep.subr.mxu0 0.0
    %208 = vmatpush2.msra.mxu0 0.0
    %209 = vmatprep.subr.mxu0 0.0
    %210 = vmatpush2.msra.mxu0 0.0
    %211 = vmatprep.subr.mxu0 0.0
    %212 = vmatpush2.msra.mxu0 0.0
    %213 = vmatprep.subr.mxu0 0.0
    %214 = vmatpush2.msra.mxu0 0.0
    %215 = vmatprep.subr.mxu0 0.0
    %216 = vmatpush2.msra.mxu0 0.0
    %217 = vmatprep.subr.mxu0 0.0
    %218 = vmatpush2.msra.mxu0 0.0
    %219 = vmatprep.subr.mxu0 0.0
    %220 = vmatpush2.msra.mxu0 0.0
    %221 = vmatprep.subr.mxu0 0.0
    %222 = vmatpush2.msra.mxu0 0.0
    %223 = vmatprep.subr.mxu0 0.0
    %224 = vmatpush2.msra.mxu0 0.0
    %225 = vmatprep.subr.mxu0 0.0
    %226 = vmatpush2.msra.mxu0 0.0
    %227 = vmatprep.subr.mxu0 0.0
    %228 = vmatpush2.msra.mxu0 0.0
    %229 = vmatprep.mubr.f32.mxu0 0.0
    %230 = vmatmul.mubr.f32.gmra.mxu0 %v141
    %v231 = vpop.f32.mrf.mxu0
    %v232 = vadd.f32 %v163, %v231
    %v233 = vpop.f32.mrf.mxu0
    %234 = vdwg.mxu0
    %v235 = vmax.f32 %v232, 0.0
    %v236 = vld [vmem:[%s5] sm:$0x1]
    %s237 = sld [smem:[#allocation2]]
    %v238 = vstv %s237
    %239 = vmatprep.subr.mxu0 0.0
    %240 = vmatpush1.xpose.msra.mxu0 0.0
    %241 = vmatprep.subr.mxu0 0.0
    %242 = vmatpush1.xpose.msra.mxu0 0.0
    %243 = vmatprep.subr.mxu0 0.0
    %244 = vmatpush1.xpose.msra.mxu0 0.0
    %245 = vmatprep.subr.mxu0 0.0
    %246 = vmatpush1.xpose.msra.mxu0 0.0
    %247 = vmatprep.subr.mxu0 0.0
    %248 = vmatpush1.xpose.msra.mxu0 0.0
    %249 = vmatprep.subr.mxu0 0.0
    %250 = vmatpush1.xpose.msra.mxu0 0.0
    %251 = vmatprep.subr.mxu0 0.0
    %252 = vmatpush1.xpose.msra.mxu0 0.0
    %253 = vmatprep.subr.mxu0 0.0
    %254 = vmatpush1.xpose.msra.mxu0 0.0
    %255 = vmatprep.subr.mxu0 0.0
    %256 = vmatpush1.xpose.msra.mxu0 0.0
    %257 = vmatprep.subr.mxu0 0.0
    %258 = vmatpush1.xpose.msra.mxu0 0.0
    %259 = vmatprep.subr.mxu0 0.0
    %260 = vmatpush1.xpose.msra.mxu0 0.0
    %261 = vmatprep.subr.mxu0 0.0
    %262 = vmatpush1.xpose.msra.mxu0 0.0
    %263 = vmatprep.subr.mxu0 0.0
    %264 = vmatpush1.xpose.msra.mxu0 0.0
    %265 = vmatprep.subr.mxu0 0.0
    %266 = vmatpush1.xpose.msra.mxu0 0.0
    %267 = vmatprep.subr.mxu0 0.0
    %268 = vmatpush1.xpose.msra.mxu0 0.0
    %269 = vmatprep.subr.mxu0 0.0
    %270 = vmatpush1.xpose.msra.mxu0 %v235
    %271 = vmatprep.subr.mxu0 0.0
    %272 = vmatpush2.xpose.msra.mxu0 0.0
    %273 = vmatprep.subr.mxu0 0.0
    %274 = vmatpush2.xpose.msra.mxu0 0.0
    %275 = vmatprep.subr.mxu0 0.0
    %276 = vmatpush2.xpose.msra.mxu0 0.0
    %277 = vmatprep.subr.mxu0 0.0
    %278 = vmatpush2.xpose.msra.mxu0 0.0
    %279 = vmatprep.subr.mxu0 0.0
    %280 = vmatpush2.xpose.msra.mxu0 0.0
    %281 = vmatprep.subr.mxu0 0.0
    %282 = vmatpush2.xpose.msra.mxu0 0.0
    %283 = vmatprep.subr.mxu0 0.0
    %284 = vmatpush2.xpose.msra.mxu0 0.0
    %285 = vmatprep.subr.mxu0 0.0
    %286 = vmatpush2.xpose.msra.mxu0 0.0
    %287 = vmatprep.subr.mxu0 0.0
    %288 = vmatpush2.xpose.msra.mxu0 0.0
    %289 = vmatprep.subr.mxu0 0.0
    %290 = vmatpush2.xpose.msra.mxu0 0.0
    %291 = vmatprep.subr.mxu0 0.0
    %292 = vmatpush2.xpose.msra.mxu0 0.0
    %293 = vmatprep.subr.mxu0 0.0
    %294 = vmatpush2.xpose.msra.mxu0 0.0
    %295 = vmatprep.subr.mxu0 0.0
    %296 = vmatpush2.xpose.msra.mxu0 0.0
    %297 = vmatprep.subr.mxu0 0.0
    %298 = vmatpush2.xpose.msra.mxu0 0.0
    %299 = vmatprep.subr.mxu0 0.0
    %300 = vmatpush2.xpose.msra.mxu0 0.0
    %301 = vmatprep.subr.mxu0 0.0
    %302 = vmatpush2.xpose.msra.mxu0 0.0
    %303 = vmatprep.mubr.f32.mxu0 0.0
    %304 = vmatmul.mubr.f32.gmra.mxu0 %v236
    %v305 = vpop.f32.mrf.mxu0
    %v306 = vadd.f32 %v238, %v305
    %v307 = vpop.f32.mrf.mxu0
    %308 = vdwg.mxu0
    %vm309 = vcmask 8192
    %310 = vst.msk [vmem:[#allocation8] sm:$0x1] %vm309, %v306
    // Predicated region
    $region38: #{critic_forward.1} parent=1 // pred_check
      _
    $region39: #{critic_forward.1} parent=1 // pred_check_branch
      %312 = sbr.rel (0) target = $region41
    $region40: #{critic_forward.1} parent=1 // pred_region
      %s314 = ssub.s32 16, 16
      %315 = vsyncadd [#allocation5], %s314
      %s317 = sshll.u32 [#allocation8], 4
      %s318 = int_to_ptr.vmem [resolvable:$true] %s317
      %320 = dma.vmem_to_hbm [thread:$0]  %s318, 16, %s7, [#allocation5]
    $region41: #{critic_forward.1} parent=1 // pred_fallthru
      _
    // Predicated region
    $region42: #{critic_forward.1} parent=1 // pred_check
      _
    $region43: #{critic_forward.1} parent=1 // pred_check_branch
      %322 = sbr.rel (0) target = $region45
    $region44: #{critic_forward.1} parent=1 // pred_region
      %323 = dma.done [#allocation5], 16
    $region45: #{critic_forward.1} parent=1 // pred_fallthru
      _
    %324 = vsyncpa [#allocation4], 1
    %325 = vsyncpa [#allocation7], 1
    %326 = vsyncpa [#allocation5], 1

</llo_original>
